<compile_context>
chip_gen: v5e
topology: v5e:2x2
jax: 0.10.0
libtpu: 0.0.40
codegen_flags: <defaults>
</compile_context>

<pallas_src>
import jax
import jax.numpy as jnp
from jax.experimental import pallas as pl
from jax.experimental.pallas import tpu as pltpu


def _round_up(a: int, b: int) -> int:
    return ((a + b - 1) // b) * b


def gcn_layer_kernel(x_ref, w_ref, b_ref, o_ref, acc_ref):
    # x_ref: (tm, tk)  tile of node features           (compute dtype, e.g. bf16)
    # w_ref: (tk, tn)  tile of transposed weight       (compute dtype)
    # b_ref: (1,  tn)  bias tile                       (float32)
    # o_ref: (tm, tn)  output tile
    # acc_ref: (tm, tn) float32 accumulator, resident across the K grid axis.
    # NOTE: correctness relies on K being the last (fastest-varying) grid axis
    # and the output index_map ignoring k.
    k = pl.program_id(2)

    contrib = jnp.dot(
        x_ref[...], w_ref[...], preferred_element_type=jnp.float32
    )

    @pl.when(k == 0)
    def _():
        acc_ref[...] = contrib           # write-on-first-step (no zero-init pass)

    @pl.when(k != 0)
    def _():
        acc_ref[...] += contrib

    @pl.when(k == pl.num_programs(2) - 1)
    def _():
        y = acc_ref[...] + b_ref[...]    # f32 bias add
        o_ref[...] = jnp.maximum(y, 0.0).astype(o_ref.dtype)


def gcn_layer(x, w_t, b, *, tm=512, tn=256, tk=2048,
              compute_dtype=jnp.bfloat16, out_dtype=None):
    """ReLU(x @ w_t + b).

    x:   (M, K)  node features
    w_t: (K, N)  weight, already transposed (nn.Linear weight .T)
    b:   (N,)    bias
    Matmul operands are cast to `compute_dtype` (bf16 by default) for the MXU;
    accumulation, bias add and ReLU happen in float32.
    """
    M, K = x.shape
    K2, N = w_t.shape
    assert K == K2, "in_features mismatch between x and weight"
    out_dtype = out_dtype or x.dtype

    # Cast matmul operands for the MXU (keep bias in f32 for the epilogue).
    if compute_dtype is not None:
        if x.dtype != compute_dtype:
            x = x.astype(compute_dtype)
        if w_t.dtype != compute_dtype:
            w_t = w_t.astype(compute_dtype)
    b2 = b.reshape(1, N).astype(jnp.float32)

    itemsize = jnp.dtype(x.dtype).itemsize
    sub = 8 if itemsize >= 4 else 16          # sublane granularity (packed bf16)
    Mp_full = _round_up(M, sub)
    Kp_full = _round_up(K, 128)
    Np_full = _round_up(N, 128)

    # Per-generation VMEM budget for the weight-resident fast path.
    try:
        info = pltpu.get_tpu_info()
        vmem_cap = int(getattr(info, "vmem_capacity_bytes", 64 * 1024 * 1024))
    except Exception:
        vmem_cap = 64 * 1024 * 1024           # conservative (v7x-sized) fallback
    w_budget = vmem_cap // 32                 # e.g. 4 MiB @128 MiB VMEM, 2 MiB @64 MiB

    w_bytes = Kp_full * Np_full * jnp.dtype(w_t.dtype).itemsize
    if w_bytes <= w_budget and Kp_full <= 2048 and Np_full <= 2048:
        # Whole weight stays resident in VMEM: DMA'd from HBM exactly once.
        tk = Kp_full
        tn = Np_full
    else:
        tk = min(tk, Kp_full)
        tn = min(tn, Np_full)
    tm = min(tm, Mp_full)

    grid_m = pl.cdiv(M, tm)
    grid_n = pl.cdiv(N, tn)
    grid_k = pl.cdiv(K, tk)

    # v7x megacore: keep >= 2 blocks on a parallel axis for tiny problems.
    if grid_m == 1 and grid_n == 1 and tn >= 256:
        tn = _round_up(tn // 2, 128)
        grid_n = pl.cdiv(N, tn)

    # Zero-pad the reduction dim only (required for correctness); ragged M/N
    # boundary blocks are read/store-masked by Pallas and never padded here.
    Kp = grid_k * tk
    if Kp != K:
        x = jnp.pad(x, ((0, 0), (0, Kp - K)))
        w_t = jnp.pad(w_t, ((0, Kp - K), (0, 0)))

    out = pl.pallas_call(
        gcn_layer_kernel,
        out_shape=jax.ShapeDtypeStruct((M, N), out_dtype),
        grid_spec=pltpu.PrefetchScalarGridSpec(
            num_scalar_prefetch=0,
            grid=(grid_m, grid_n, grid_k),
            in_specs=[
                pl.BlockSpec((tm, tk), lambda i, j, k: (i, k)),  # x tile
                pl.BlockSpec((tk, tn), lambda i, j, k: (k, j)),  # weight tile
                pl.BlockSpec((1, tn), lambda i, j, k: (0, j)),   # bias tile
            ],
            out_specs=pl.BlockSpec((tm, tn), lambda i, j, k: (i, j)),
            scratch_shapes=[pltpu.VMEM((tm, tn), jnp.float32)],
        ),
        compiler_params=pltpu.CompilerParams(
            dimension_semantics=("parallel", "parallel", "arbitrary"),
        ),
    )(x, w_t, b2)
    return out


def reference_gcn_layer(x, w_t, b, compute_dtype=jnp.bfloat16):
    if compute_dtype is not None:
        acc = jnp.dot(x.astype(compute_dtype), w_t.astype(compute_dtype),
                      preferred_element_type=jnp.float32)
    else:
        acc = jnp.dot(x, w_t, precision=jax.lax.Precision.HIGHEST)
    return jnp.maximum(acc + b[None, :].astype(jnp.float32), 0.0).astype(x.dtype)


if __name__ == "__main__":
    key = jax.random.PRNGKey(0)

    # Case 1: small shapes consistent with the module: 16 nodes, 128 -> 128.
    num_nodes, in_features, out_features = 16, 128, 128
    kx, kw, kb, kx2, kw2, kb2 = jax.random.split(key, 6)

    bound = 1.0 / (in_features ** 0.5)
    w = jax.random.uniform(kw, (out_features, in_features), jnp.float32, -bound, bound)
    b = jax.random.uniform(kb, (out_features,), jnp.float32, -bound, bound)
    w_t = w.T
    x = jax.random.normal(kx, (num_nodes, in_features), jnp.float32)

    out = jax.block_until_ready(gcn_layer(x, w_t, b))
    ref_bf16 = reference_gcn_layer(x, w_t, b, compute_dtype=jnp.bfloat16)
    ref_f32 = reference_gcn_layer(x, w_t, b, compute_dtype=None)
    assert out.shape == (num_nodes, out_features)
    assert out.dtype == x.dtype
    assert jnp.allclose(out, ref_bf16, atol=2e-3, rtol=2e-3), "mismatch vs bf16 reference"
    assert jnp.allclose(out, ref_f32, atol=5e-2, rtol=5e-2), "mismatch vs f32 reference"

    # Case 2: ragged shapes exercising the masked-boundary / K-padding path.
    M2, K2, N2 = 20, 96, 40
    bound2 = 1.0 / (K2 ** 0.5)
    w2 = jax.random.uniform(kw2, (N2, K2), jnp.float32, -bound2, bound2)
    b2 = jax.random.uniform(kb2, (N2,), jnp.float32, -bound2, bound2)
    x2 = jax.random.normal(kx2, (M2, K2), jnp.float32)

    out2 = jax.block_until_ready(gcn_layer(x2, w2.T, b2))
    ref2_bf16 = reference_gcn_layer(x2, w2.T, b2, compute_dtype=jnp.bfloat16)
    ref2_f32 = reference_gcn_layer(x2, w2.T, b2, compute_dtype=None)
    assert out2.shape == (M2, N2)
    assert jnp.allclose(out2, ref2_bf16, atol=2e-3, rtol=2e-3), "mismatch vs bf16 reference (ragged)"
    assert jnp.allclose(out2, ref2_f32, atol=5e-2, rtol=5e-2), "mismatch vs f32 reference (ragged)"

    print("KERNEL_OK")
</pallas_src>

<mosaic_0001>
module attributes {stable_mosaic.version = 11 : i64} {
  func.func @gcn_layer_kernel(%arg0: i32, %arg1: i32, %arg2: i32, %arg3: memref<16x128xbf16, #tpu.memory_space<vmem>>, %arg4: memref<128x128xbf16, #tpu.memory_space<vmem>>, %arg5: memref<1x128xf32, #tpu.memory_space<vmem>>, %arg6: memref<16x128xf32, #tpu.memory_space<vmem>>, %arg7: memref<16x128xf32, #tpu.memory_space<vmem>>) attributes {dimension_semantics = [#tpu.dimension_semantics<parallel>, #tpu.dimension_semantics<parallel>, #tpu.dimension_semantics<arbitrary>], iteration_bounds = array<i64: 1, 1, 1>, scalar_prefetch = 0 : i64, scratch_operands = 1 : i64, tpu.core_type = #tpu.core_type<tc>, window_params = [{transform_indices = @transform_0, window_bounds = array<i64: 16, 128>}, {transform_indices = @transform_1, window_bounds = array<i64: 128, 128>}, {transform_indices = @transform_2, window_bounds = array<i64: 1, 128>}, {transform_indices = @transform_3, window_bounds = array<i64: 16, 128>}]} {
    %c0 = arith.constant 0 : index
    %c0_0 = arith.constant 0 : index
    %0 = vector.load %arg3[%c0, %c0_0] : memref<16x128xbf16, #tpu.memory_space<vmem>>, vector<16x128xbf16>
    %c0_1 = arith.constant 0 : index
    %c0_2 = arith.constant 0 : index
    %1 = vector.load %arg4[%c0_1, %c0_2] : memref<128x128xbf16, #tpu.memory_space<vmem>>, vector<128x128xbf16>
    %cst = arith.constant dense<0.000000e+00> : vector<16x128xf32>
    %2 = tpu.matmul %0, %1, %cst {dimension_numbers = #tpu.dot_dimension_numbers<[1], [0], [0], [1], [0, 0, 1, 1], [], []>} : vector<16x128xbf16>, vector<128x128xbf16>, vector<16x128xf32> -> vector<16x128xf32>
    %c0_i32 = arith.constant 0 : i32
    %3 = arith.cmpi eq, %arg2, %c0_i32 : i32
    %4 = arith.extui %3 : i1 to i32
    %c0_i32_3 = arith.constant 0 : i32
    %5 = arith.cmpi ne, %4, %c0_i32_3 : i32
    scf.if %5 {
      %c0_8 = arith.constant 0 : index
      %c0_9 = arith.constant 0 : index
      %12 = vector.load %arg7[%c0_8, %c0_9] : memref<16x128xf32, #tpu.memory_space<vmem>>, vector<16x128xf32>
      tpu.vector_store %arg7[%c0_8, %c0_9], %2 {strides = array<i32>} : memref<16x128xf32, #tpu.memory_space<vmem>>, vector<16x128xf32>,
    } else {
    }
    %c0_i32_4 = arith.constant 0 : i32
    %6 = arith.cmpi ne, %arg2, %c0_i32_4 : i32
    %7 = arith.extui %6 : i1 to i32
    %c0_i32_5 = arith.constant 0 : i32
    %8 = arith.cmpi ne, %7, %c0_i32_5 : i32
    scf.if %8 {
      %c0_8 = arith.constant 0 : index
      %c0_9 = arith.constant 0 : index
      %12 = vector.load %arg7[%c0_8, %c0_9] : memref<16x128xf32, #tpu.memory_space<vmem>>, vector<16x128xf32>
      %13 = arith.addf %12, %2 : vector<16x128xf32>
      %c0_10 = arith.constant 0 : index
      %c0_11 = arith.constant 0 : index
      %14 = vector.load %arg7[%c0_10, %c0_11] : memref<16x128xf32, #tpu.memory_space<vmem>>, vector<16x128xf32>
      tpu.vector_store %arg7[%c0_10, %c0_11], %13 {strides = array<i32>} : memref<16x128xf32, #tpu.memory_space<vmem>>, vector<16x128xf32>,
    } else {
    }
    %c0_i32_6 = arith.constant 0 : i32
    %9 = arith.cmpi eq, %arg2, %c0_i32_6 : i32
    %10 = arith.extui %9 : i1 to i32
    %c0_i32_7 = arith.constant 0 : i32
    %11 = arith.cmpi ne, %10, %c0_i32_7 : i32
    scf.if %11 {
      %c0_8 = arith.constant 0 : index
      %c0_9 = arith.constant 0 : index
      %12 = vector.load %arg7[%c0_8, %c0_9] : memref<16x128xf32, #tpu.memory_space<vmem>>, vector<16x128xf32>
      %c0_10 = arith.constant 0 : index
      %c0_11 = arith.constant 0 : index
      %13 = vector.load %arg5[%c0_10, %c0_11] : memref<1x128xf32, #tpu.memory_space<vmem>>, vector<1x128xf32>
      %14 = vector.broadcast %13 : vector<1x128xf32> to vector<16x128xf32>
      %15 = arith.addf %12, %14 : vector<16x128xf32>
      %cst_12 = arith.constant 0.000000e+00 : f32
      %16 = vector.broadcast %cst_12 : f32 to vector<16x128xf32>
      %17 = arith.maximumf %15, %16 : vector<16x128xf32>
      %c0_13 = arith.constant 0 : index
      %c0_14 = arith.constant 0 : index
      %18 = vector.load %arg6[%c0_13, %c0_14] : memref<16x128xf32, #tpu.memory_space<vmem>>, vector<16x128xf32>
      tpu.vector_store %arg6[%c0_13, %c0_14], %17 {strides = array<i32>} : memref<16x128xf32, #tpu.memory_space<vmem>>, vector<16x128xf32>,
    } else {
    }
    return
  }
  func.func @transform_0(%arg0: i32, %arg1: i32, %arg2: i32) -> (i32, i32) {
    %c0_i32 = arith.constant 0 : i32
    return %arg0, %arg2 : i32, i32
  }
  func.func @transform_1(%arg0: i32, %arg1: i32, %arg2: i32) -> (i32, i32) {
    %c0_i32 = arith.constant 0 : i32
    return %arg2, %arg1 : i32, i32
  }
  func.func @transform_2(%arg0: i32, %arg1: i32, %arg2: i32) -> (i32, i32) {
    %c0_i32 = arith.constant 0 : i32
    %c0_i32_0 = arith.constant 0 : i32
    return %c0_i32, %arg1 : i32, i32
  }
  func.func @transform_3(%arg0: i32, %arg1: i32, %arg2: i32) -> (i32, i32) {
    %c0_i32 = arith.constant 0 : i32
    return %arg0, %arg1 : i32, i32
  }
}

</mosaic_0001>

<llo_original>
// kernel: tpu_custom_call.1
$region0: #{tpu_custom_call.1}
  #allocation0 [shape = 'u32[]', space=smem, size = 0x4, offset = 0x4, fixed_abs, tag = 'smem constant byte address 0x4 - core index']
  #allocation1 [shape = 'u32[72,128]{1,0:T(1,128)}', space=vmem, size = 0x9000, scoped, tag = 'internal scratch']
  #allocation2 [shape = 'f32[16,128]{1,0:T(8,128)}', space=vmem, size = 0x2000, scoped, tag = 'scratch operand']
  %s0 = inlined_call_operand.hbm [shape: bf16[16,128], index: 0, kind: input, shape index: {}]
  %s1 = inlined_call_operand.hbm [shape: bf16[128,128], index: 1, kind: input, shape index: {}]
  %s2 = inlined_call_operand.vmem [shape: f32[1,128], index: 2, kind: input, shape index: {}]
  %s3 = inlined_call_operand.hbm [shape: f32[16,128], index: 3, kind: output, shape index: {}]
  %s4 = sld [smem:[#allocation0]]
  $region42: #{tpu_custom_call.1} parent=0
    _
  %s6 = ssub.s32 1, %s4
  %s7 = scalar_select 0, %s6, %s4
  $region1: #{tpu_custom_call.1} parent=0
    #allocation3 [shape = 'u8[4096]{0}', space=vmem, size = 0x1000, scoped, tag = 'input window, operand 0, single buffered']
    #allocation4 [shape = 's32[1]{0}', space=sflag, size = 0x4, scoped, tag = 'scoped memory for tpu_custom_call.1']
    #allocation5 [shape = 's32[1]{0}', space=sflag, size = 0x4, scoped, tag = 'scoped memory for tpu_custom_call.1']
    #allocation6 [shape = 'u8[32768]{0}', space=vmem, size = 0x8000, scoped, tag = 'input window, operand 1, single buffered']
    #allocation7 [shape = 's32[1]{0}', space=sflag, size = 0x4, scoped, tag = 'scoped memory for tpu_custom_call.1']
    #allocation8 [shape = 'u8[8192]{0}', space=vmem, size = 0x2000, scoped, tag = 'output window, operand 0, single buffered']
    %8 = vsyncpa [#allocation4], 0
    %9 = vsyncpa [#allocation7], 0
    %10 = vsyncpa [#allocation5], 0
    // Predicated region
    $region2: #{tpu_custom_call.1} parent=1 // pred_check
      _
    $region3: #{tpu_custom_call.1} parent=1 // pred_check_branch
      %12 = sbr.rel (0) target = $region5
    $region4: #{tpu_custom_call.1} parent=1 // pred_region
      %14 = vsyncadd [#allocation4], 0
      %s15 = sshll.u32 %s0, 4
      %s16 = int_to_ptr.hbm [resolvable:$true] %s15
      %s17 = sshll.u32 [#allocation3], 4
      %s18 = int_to_ptr.vmem [resolvable:$true] %s17
      %23 = dma.hbm_to_vmem [thread:$0]  %s16, 128, %s18, [#allocation4], 64, 64, 4
    $region5: #{tpu_custom_call.1} parent=1 // pred_fallthru
      _
    // Predicated region
    $region6: #{tpu_custom_call.1} parent=1 // pred_check
      _
    $region7: #{tpu_custom_call.1} parent=1 // pred_check_branch
      %25 = sbr.rel (0) target = $region9
    $region8: #{tpu_custom_call.1} parent=1 // pred_region
      %27 = vsyncadd [#allocation7], 0
      %s28 = sshll.u32 %s1, 4
      %s29 = int_to_ptr.hbm [resolvable:$true] %s28
      %s30 = sshll.u32 [#allocation6], 4
      %s31 = int_to_ptr.vmem [resolvable:$true] %s30
      %36 = dma.hbm_to_vmem [thread:$0]  %s29, 1024, %s31, [#allocation7], 64, 64, 4
    $region9: #{tpu_custom_call.1} parent=1 // pred_fallthru
      _
    // Predicated region
    $region10: #{tpu_custom_call.1} parent=1 // pred_check
      _
    $region11: #{tpu_custom_call.1} parent=1 // pred_check_branch
      %38 = sbr.rel (0) target = $region13
    $region12: #{tpu_custom_call.1} parent=1 // pred_region
      _
    $region13: #{tpu_custom_call.1} parent=1 // pred_fallthru
      _
    // Predicated region
    $region14: #{tpu_custom_call.1} parent=1 // pred_check
      _
    $region15: #{tpu_custom_call.1} parent=1 // pred_check_branch
      %40 = sbr.rel (0) target = $region17
    $region16: #{tpu_custom_call.1} parent=1 // pred_region
      %42 = dma.done [#allocation4], 128
    $region17: #{tpu_custom_call.1} parent=1 // pred_fallthru
      _
    // Predicated region
    $region18: #{tpu_custom_call.1} parent=1 // pred_check
      _
    $region19: #{tpu_custom_call.1} parent=1 // pred_check_branch
      %44 = sbr.rel (0) target = $region21
    $region20: #{tpu_custom_call.1} parent=1 // pred_region
      %46 = dma.done [#allocation7], 1024
    $region21: #{tpu_custom_call.1} parent=1 // pred_fallthru
      _
    %v47 = vld [vmem:[#allocation3] sm:$0xf]
    %v48 = vld [vmem:[#allocation3 + $0x4] sm:$0xf]
    %v49 = vld [vmem:[#allocation6] sm:$0xf]
    %v50 = vld [vmem:[#allocation6 + $0x4] sm:$0xf]
    %v51 = vld [vmem:[#allocation6 + $0x8] sm:$0xf]
    %v52 = vld [vmem:[#allocation6 + $0xc] sm:$0xf]
    %v53 = vld [vmem:[#allocation6 + $0x10] sm:$0xf]
    %v54 = vld [vmem:[#allocation6 + $0x14] sm:$0xf]
    %v55 = vld [vmem:[#allocation6 + $0x18] sm:$0xf]
    %v56 = vld [vmem:[#allocation6 + $0x1c] sm:$0xf]
    %v57 = vld [vmem:[#allocation6 + $0x20] sm:$0xf]
    %v58 = vld [vmem:[#allocation6 + $0x24] sm:$0xf]
    %v59 = vld [vmem:[#allocation6 + $0x28] sm:$0xf]
    %v60 = vld [vmem:[#allocation6 + $0x2c] sm:$0xf]
    %v61 = vld [vmem:[#allocation6 + $0x30] sm:$0xf]
    %v62 = vld [vmem:[#allocation6 + $0x34] sm:$0xf]
    %v63 = vld [vmem:[#allocation6 + $0x38] sm:$0xf]
    %v64 = vld [vmem:[#allocation6 + $0x3c] sm:$0xf]
    %v67 = vunpack.c.l.b16 %v47
    %v68 = vunpack.c.l.b16 %v48
    %v69 = vpack.c.b16 %v68, %v67
    %v87 = vunpack.c.l.b16 %v49
    %v88 = vunpack.c.l.b16 %v50
    %v89 = vunpack.c.l.b16 %v51
    %v90 = vunpack.c.l.b16 %v52
    %v91 = vunpack.c.l.b16 %v53
    %v92 = vunpack.c.l.b16 %v54
    %v93 = vunpack.c.l.b16 %v55
    %v94 = vunpack.c.l.b16 %v56
    %v95 = vunpack.c.l.b16 %v57
    %v96 = vunpack.c.l.b16 %v58
    %v97 = vunpack.c.l.b16 %v59
    %v98 = vunpack.c.l.b16 %v60
    %v99 = vunpack.c.l.b16 %v61
    %v100 = vunpack.c.l.b16 %v62
    %v101 = vunpack.c.l.b16 %v63
    %v102 = vunpack.c.l.b16 %v64
    %v103 = vpack.c.b16 %v88, %v87
    %v104 = vpack.c.b16 %v90, %v89
    %v105 = vpack.c.b16 %v92, %v91
    %v106 = vpack.c.b16 %v94, %v93
    %v107 = vpack.c.b16 %v96, %v95
    %v108 = vpack.c.b16 %v98, %v97
    %v109 = vpack.c.b16 %v100, %v99
    %v110 = vpack.c.b16 %v102, %v101
    %119 = vmatpush.bf16.msra.mxu0 %v110
    %120 = vmatpush.bf16.msra.mxu0 %v109
    %121 = vmatpush.bf16.msra.mxu0 %v108
    %122 = vmatpush.bf16.msra.mxu0 %v107
    %123 = vmatpush.bf16.msra.mxu0 %v106
    %124 = vmatpush.bf16.msra.mxu0 %v105
    %125 = vmatpush.bf16.msra.mxu0 %v104
    %126 = vmatpush.bf16.msra.mxu0 %v103
    %127 = vmatmul.bf16.gmra.mxu0 %v69
    %v128 = vpop.f32.mrf.mxu0
    %v129 = vadd.f32 0.0, %v128
    %v130 = vpop.f32.mrf.mxu0
    %v131 = vadd.f32 0.0, %v130
    %132 = vdwg.mxu0
    %p133 = scmp.eq.s32.totalorder 0, 0
    // Predicated region
    $region22: #{tpu_custom_call.1} parent=1 // pred_check
      %p134 = pneg %p133
    $region23: #{tpu_custom_call.1} parent=1 // pred_check_branch
      %136 = sbr.rel (%p134) target = $region25
    $region24: #{tpu_custom_call.1} parent=1 // pred_region
      %137 = vst [vmem:[#allocation2] sm:$0xff] %v129
      %138 = vst [vmem:[#allocation2 + $0x8] sm:$0xff] %v131
    $region25: #{tpu_custom_call.1} parent=1 // pred_fallthru
      _
    %p139 = scmp.ne.s32.totalorder 0, 0
    // Predicated region
    $region26: #{tpu_custom_call.1} parent=1 // pred_check
      %p140 = pneg %p139
    $region27: #{tpu_custom_call.1} parent=1 // pred_check_branch
      %142 = sbr.rel (%p140) target = $region29
    $region28: #{tpu_custom_call.1} parent=1 // pred_region
      %v143 = vld [vmem:[#allocation2] sm:$0xff]
      %v144 = vld [vmem:[#allocation2 + $0x8] sm:$0xff]
      %v145 = vadd.f32 %v143, %v129
      %v146 = vadd.f32 %v144, %v131
      %147 = vst [vmem:[#allocation2] sm:$0xff] %v145
      %148 = vst [vmem:[#allocation2 + $0x8] sm:$0xff] %v146
    $region29: #{tpu_custom_call.1} parent=1 // pred_fallthru
      _
    // Predicated region
    $region30: #{tpu_custom_call.1} parent=1 // pred_check
      %p149 = pneg %p133
    $region31: #{tpu_custom_call.1} parent=1 // pred_check_branch
      %151 = sbr.rel (%p149) target = $region33
    $region32: #{tpu_custom_call.1} parent=1 // pred_region
      %v152 = vld [vmem:[#allocation2] sm:$0xff]
      %v153 = vld [vmem:[#allocation2 + $0x8] sm:$0xff]
      %v154 = vld [vmem:[%s2] sm:$0x1]
      %v156 = vperm.slane %v154, 0
      %v158 = vadd.f32 %v152, %v156
      %v159 = vadd.f32 %v153, %v156
      %v160 = vmax.f32 %v158, 0.0
      %v161 = vmax.f32 %v159, 0.0
      %162 = vst [vmem:[#allocation8] sm:$0xff] %v160
      %163 = vst [vmem:[#allocation8 + $0x8] sm:$0xff] %v161
    $region33: #{tpu_custom_call.1} parent=1 // pred_fallthru
      _
    // Predicated region
    $region34: #{tpu_custom_call.1} parent=1 // pred_check
      _
    $region35: #{tpu_custom_call.1} parent=1 // pred_check_branch
      %165 = sbr.rel (0) target = $region37
    $region36: #{tpu_custom_call.1} parent=1 // pred_region
      %167 = vsyncadd [#allocation5], 0
      %s168 = sshll.u32 [#allocation8], 4
      %s169 = int_to_ptr.vmem [resolvable:$true] %s168
      %s170 = sshll.u32 %s3, 4
      %s171 = int_to_ptr.hbm [resolvable:$true] %s170
      %176 = dma.vmem_to_hbm [thread:$0]  %s169, 256, %s171, [#allocation5], 128, 128, 8
    $region37: #{tpu_custom_call.1} parent=1 // pred_fallthru
      _
    // Predicated region
    $region38: #{tpu_custom_call.1} parent=1 // pred_check
      _
    $region39: #{tpu_custom_call.1} parent=1 // pred_check_branch
      %178 = sbr.rel (0) target = $region41
    $region40: #{tpu_custom_call.1} parent=1 // pred_region
      %180 = dma.done [#allocation5], 256
    $region41: #{tpu_custom_call.1} parent=1 // pred_fallthru
      _
    %181 = vsyncpa [#allocation4], 1
    %182 = vsyncpa [#allocation7], 1
    %183 = vsyncpa [#allocation5], 1

</llo_original>
